<compile_context>
chip_gen: v7x
topology: tpu7x:2x2x1
jax: 0.10.0
libtpu: 0.0.40
codegen_flags: <defaults>
</compile_context>

<pallas_src>
import functools

import jax
import jax.numpy as jnp
from jax.experimental import pallas as pl
from jax.experimental.pallas import tpu as pltpu

DIM = 2                    # state_dim
MU = 1.0                   # Van der Pol damping parameter (module default)
DT = 0.05                  # unused by forward (kept for fidelity)
TIME_SPAN = (0.0, 10.0)    # unused by forward
NOISE_LEVEL = 0.0          # unused by forward

_LANE = 128                # TPU lane width
_SUB = 8                   # f32 sublane tile
_TS_MAX = 4096             # max rows per tile: 4096*128*4B = 2 MiB per f32 tile
_PALLAS_MIN_BATCH = 8192   # below this, a fused jnp expression beats a kernel launch


def _round_up(a: int, b: int) -> int:
    return ((a + b - 1) // b) * b


@functools.lru_cache(maxsize=None)
def _roll_plus_one_shift() -> int:
    """Static shift s with pltpu.roll(v, s, axis=-1)[..., i] == v[..., (i+1) % 128].

    pltpu.roll follows jnp.roll semantics (s = 127 here); probe once on the
    device so the kernel stays correct regardless of the rotate convention.
    """
    def probe_kernel(x_ref, o_ref):
        o_ref[...] = pltpu.roll(x_ref[...], 1, axis=1)

    lanes = jax.lax.broadcasted_iota(jnp.int32, (_SUB, _LANE), 1)
    rolled = pl.pallas_call(
        probe_kernel,
        out_shape=jax.ShapeDtypeStruct((_SUB, _LANE), jnp.int32),
    )(lanes)
    first = int(jax.device_get(rolled)[0, 0])
    # jnp.roll convention -> first == 127 ; opposite convention -> first == 1.
    return 127 if first == 127 else 1


def _vdp_kernel(x_ref, o_ref, *, mu: float, plus_shift: int):
    """Van der Pol field on one lane-interleaved (TS, 128) tile.

    Lanes hold [x0, x1, x0, x1, ...]; the output uses the same layout:
      even lanes: dx0 = x1
      odd  lanes: dx1 = mu * (1 - x0^2) * x1 - x0
    """
    x = x_ref[...].astype(jnp.float32)                       # (TS, 128)
    nxt = pltpu.roll(x, plus_shift, axis=1)                  # lane i -> x[i+1]
    prv = pltpu.roll(x, _LANE - plus_shift, axis=1)          # lane i -> x[i-1]
    lane = jax.lax.broadcasted_iota(jnp.int32, x.shape, 1)
    is_x0_lane = (lane % 2) == 0
    # Partner of each element within its (x0, x1) pair.  Pairs never straddle
    # a 128-lane row (their first flat index is even), and the roll wrap-around
    # only lands on the discarded side of the selects below.
    partner = jnp.where(is_x0_lane, nxt, prv)                # x1 | x0
    dx_odd = mu * (1.0 - partner * partner) * x - partner    # valid at odd lanes
    o_ref[...] = jnp.where(is_x0_lane, partner, dx_odd).astype(o_ref.dtype)


def van_der_pol_forward(t, x, mu=MU, *, use_pallas=None):
    """Pallas wrapper mirroring VanDerPol.forward(t, x) -> dx/dt.

    `t` is unused (autonomous system); `mu` must be a static Python float
    (folded into the kernel as a compile-time constant).
    """
    del t  # autonomous vector field
    x = jnp.asarray(x)
    if x.ndim == 1:                         # matches torch unsqueeze(0)
        x = x[None, :]
    B, D = x.shape
    assert D == DIM, f"expected state_dim={DIM}, got {D}"
    mu = float(mu)

    if use_pallas is None:
        use_pallas = B >= _PALLAS_MIN_BATCH
    if not use_pallas:
        # Small-batch fast path: 5 elementwise ops, fused into the caller by XLA.
        x0, x1 = x[:, 0], x[:, 1]
        return jnp.stack([x1, mu * (1.0 - x0 * x0) * x1 - x0], axis=1)

    n = B * D
    n_pad = _round_up(n, _LANE)
    flat = x.reshape(n)                     # free: (B, 2) is contiguous row-major
    if n_pad != n:                          # only when B % 64 != 0
        flat = jnp.pad(flat, (0, n_pad - n))
    S = n_pad // _LANE
    xr = flat.reshape(S, _LANE)             # lane-interleaved [x0, x1, x0, x1, ...]

    # Sublane granularity of the native tile for this dtype: 8 (f32), 16 (bf16).
    sub = _SUB * max(1, 4 // jnp.dtype(x.dtype).itemsize)
    if S <= sub:
        TS = S                              # single tiny block (== full dims: legal)
    else:
        # >= 2 grid steps whenever possible so v7x can shard across its two TCs.
        TS = min(_TS_MAX, max(sub, _round_up(pl.cdiv(S, 2), sub)))
    grid = pl.cdiv(S, TS)                   # ragged last block handled by Pallas

    kernel = functools.partial(
        _vdp_kernel, mu=mu, plus_shift=_roll_plus_one_shift())

    out = pl.pallas_call(
        kernel,
        out_shape=jax.ShapeDtypeStruct((S, _LANE), x.dtype),
        grid=(grid,),
        in_specs=[pl.BlockSpec((TS, _LANE), lambda i: (i, 0))],
        out_specs=pl.BlockSpec((TS, _LANE), lambda i: (i, 0)),
        compiler_params=pltpu.CompilerParams(
            dimension_semantics=("parallel",)),
    )(xr)

    return out.reshape(n_pad)[:n].reshape(B, D)


if __name__ == "__main__":
    root = jax.random.PRNGKey(0)
    k1, k2, k3 = jax.random.split(root, 3)
    t = jnp.float32(0.0)

    def ref_fn(x, mu=MU):
        xf = x.astype(jnp.float32)
        return jnp.stack(
            [xf[:, 1], mu * (1.0 - xf[:, 0] ** 2) * xf[:, 1] - xf[:, 0]], axis=1)

    # 1) tiny batch through the Pallas kernel (single (1, 128) block).
    x_a = jax.random.normal(k1, (8, DIM), dtype=jnp.float32)
    out_a = jax.block_until_ready(van_der_pol_forward(t, x_a, use_pallas=True))
    assert out_a.shape == (8, DIM) and out_a.dtype == x_a.dtype
    assert jnp.allclose(out_a, ref_fn(x_a), atol=1e-5, rtol=1e-5)

    # 2) batch not a multiple of 64 -> lane pad + multi-step ragged grid.
    x_b = jax.random.normal(k2, (777, DIM), dtype=jnp.float32)
    out_b = jax.block_until_ready(van_der_pol_forward(t, x_b, use_pallas=True))
    assert out_b.shape == (777, DIM)
    assert jnp.allclose(out_b, ref_fn(x_b), atol=1e-5, rtol=1e-5)

    # 3) bf16 storage (f32 compute inside the kernel).
    x_c = jax.random.normal(k3, (256, DIM), dtype=jnp.bfloat16)
    out_c = jax.block_until_ready(van_der_pol_forward(t, x_c, use_pallas=True))
    assert out_c.dtype == jnp.bfloat16
    assert jnp.allclose(out_c.astype(jnp.float32), ref_fn(x_c), atol=5e-2, rtol=5e-2)

    # 4) default small-batch fast path and 1-D input (torch unsqueeze behavior).
    out_d = jax.block_until_ready(van_der_pol_forward(t, x_a))
    assert jnp.allclose(out_d, ref_fn(x_a), atol=1e-5, rtol=1e-5)
    out_e = jax.block_until_ready(van_der_pol_forward(t, x_a[0], use_pallas=True))
    assert out_e.shape == (1, DIM)
    assert jnp.allclose(out_e[0], ref_fn(x_a[:1])[0], atol=1e-5, rtol=1e-5)

    print("KERNEL_OK")
</pallas_src>

<mosaic_0001>
module attributes {stable_mosaic.version = 11 : i64} {
  func.func @probe_kernel(%arg0: memref<8x128xi32, #tpu.memory_space<vmem>>, %arg1: memref<8x128xi32, #tpu.memory_space<vmem>>) attributes {dimension_semantics = [], scalar_prefetch = 0 : i64, scratch_operands = 0 : i64, tpu.core_type = #tpu.core_type<tc>} {
    %c0 = arith.constant 0 : index
    %c0_0 = arith.constant 0 : index
    %0 = vector.load %arg0[%c0, %c0_0] : memref<8x128xi32, #tpu.memory_space<vmem>>, vector<8x128xi32>
    %c1_i32 = arith.constant 1 : i32
    %1 = tpu.dynamic_rotate %0 by %c1_i32 dim 1 : vector<8x128xi32>, i32 -> vector<8x128xi32>
    %c0_1 = arith.constant 0 : index
    %c0_2 = arith.constant 0 : index
    %2 = vector.load %arg1[%c0_1, %c0_2] : memref<8x128xi32, #tpu.memory_space<vmem>>, vector<8x128xi32>
    tpu.vector_store %arg1[%c0_1, %c0_2], %1 {strides = array<i32>} : memref<8x128xi32, #tpu.memory_space<vmem>>, vector<8x128xi32>,
    return
  }
}

</mosaic_0001>

<llo_original>
// kernel: tpu_custom_call.1
$region0: #{tpu_custom_call.1}
  #allocation0 [shape = 'u32[]', space=smem, size = 0x4, offset = 0x4, fixed_abs, tag = 'smem constant byte address 0x4 - core index']
  #allocation1 [shape = 'u32[144,128]{1,0:T(1,128)}', space=vmem, size = 0x12000, scoped, tag = 'internal scratch']
  %s0 = inlined_call_operand.hbm [shape: s32[8,128], index: 0, kind: input, shape index: {}]
  %s1 = inlined_call_operand.hbm [shape: s32[8,128], index: 1, kind: output, shape index: {}]
  %s2 = sld [smem:[#allocation0]]
  $region18: #{tpu_custom_call.1} parent=0
    _
  %s4 = ssub.s32 1, %s2
  %s5 = scalar_select 0, %s4, %s2
  $region1: #{tpu_custom_call.1} parent=0
    #allocation2 [shape = 'u8[4096]{0}', space=vmem, size = 0x1000, scoped, tag = 'input window, operand 0, single buffered']
    #allocation3 [shape = 's32[1]{0}', space=sflag, size = 0x4, scoped, tag = 'scoped memory for tpu_custom_call.1']
    #allocation4 [shape = 's32[1]{0}', space=sflag, size = 0x4, scoped, tag = 'scoped memory for tpu_custom_call.1']
    #allocation5 [shape = 'u8[4096]{0}', space=vmem, size = 0x1000, scoped, tag = 'output window, operand 0, single buffered']
    %6 = vsyncpa [#allocation3], 0
    %7 = vsyncpa [#allocation4], 0
    // Predicated region
    $region2: #{tpu_custom_call.1} parent=1 // pred_check
      _
    $region3: #{tpu_custom_call.1} parent=1 // pred_check_branch
      %9 = sbr.rel (0) target = $region5
    $region4: #{tpu_custom_call.1} parent=1 // pred_region
      %s11 = ssub.s32 128, 128
      %12 = vsyncadd [#allocation3], %s11
      %s14 = sshll.u32 [#allocation2], 4
      %s15 = int_to_ptr.vmem [resolvable:$true] %s14
      %17 = dma.hbm_to_vmem [thread:$0]  %s0, 128, %s15, [#allocation3]
    $region5: #{tpu_custom_call.1} parent=1 // pred_fallthru
      _
    // Predicated region
    $region6: #{tpu_custom_call.1} parent=1 // pred_check
      _
    $region7: #{tpu_custom_call.1} parent=1 // pred_check_branch
      %19 = sbr.rel (0) target = $region9
    $region8: #{tpu_custom_call.1} parent=1 // pred_region
      %20 = dma.done [#allocation3], 128
    $region9: #{tpu_custom_call.1} parent=1 // pred_fallthru
      _
    %v21 = vld [vmem:[#allocation2] sm:$0xff]
    %22 = vrot.lane.b32.xlu0 %v21, 1
    %v23 = vpop.permute.xlu0 %22
    %24 = vst [vmem:[#allocation5] sm:$0xff] %v23
    // Predicated region
    $region10: #{tpu_custom_call.1} parent=1 // pred_check
      _
    $region11: #{tpu_custom_call.1} parent=1 // pred_check_branch
      %26 = sbr.rel (0) target = $region13
    $region12: #{tpu_custom_call.1} parent=1 // pred_region
      %s28 = ssub.s32 128, 128
      %29 = vsyncadd [#allocation4], %s28
      %s31 = sshll.u32 [#allocation5], 4
      %s32 = int_to_ptr.vmem [resolvable:$true] %s31
      %34 = dma.vmem_to_hbm [thread:$0]  %s32, 128, %s1, [#allocation4]
    $region13: #{tpu_custom_call.1} parent=1 // pred_fallthru
      _
    // Predicated region
    $region14: #{tpu_custom_call.1} parent=1 // pred_check
      _
    $region15: #{tpu_custom_call.1} parent=1 // pred_check_branch
      %36 = sbr.rel (0) target = $region17
    $region16: #{tpu_custom_call.1} parent=1 // pred_region
      %37 = dma.done [#allocation4], 128
    $region17: #{tpu_custom_call.1} parent=1 // pred_fallthru
      _
    %38 = vsyncpa [#allocation3], 1
    %39 = vsyncpa [#allocation4], 1

</llo_original>
